<compile_context>
chip_gen: v5e
topology: v5e:2x2
jax: 0.10.0
libtpu: 0.0.40
codegen_flags: <defaults>
</compile_context>

<pallas_src>
import numpy as np
import jax
import jax.numpy as jnp
from jax.experimental import pallas as pl
from jax.experimental.pallas import tpu as pltpu


# ----------------------------------------------------------------------------
# Kernels
# ----------------------------------------------------------------------------
def _packed_mlp_kernel(num_layers):
    """Shared-input path. Args: x(tb, Din), [W_i(di, do), b_i(1, do)] * L,
    out(tb, E*Dout). All weight blocks are constant across the B grid."""

    def kernel(x_ref, *refs):
        out_ref = refs[-1]
        wb = refs[:-1]
        h = x_ref[...]                                          # (tb, Din) f32
        for i in range(num_layers):
            W = wb[2 * i][...]                                  # (d_in, d_out)
            b = wb[2 * i + 1][...]                              # (1,   d_out)
            h = jnp.dot(h, W, preferred_element_type=jnp.float32) + b
            if i < num_layers - 1:
                h = jnp.maximum(h, 0.0)                         # relu
        out_ref[...] = h                                        # identity out act

    return kernel


def _member_mlp_kernel(num_layers):
    """Per-member (3-D input) path. Args: x(1, B, Din),
    [W_i(1, di, do), b_i(1, 1, do)] * L, out(1, B, Dout)."""

    def kernel(x_ref, *refs):
        out_ref = refs[-1]
        wb = refs[:-1]
        h = x_ref[0]                                            # (B, Din)
        for i in range(num_layers):
            W = wb[2 * i][0]                                    # (d_in, d_out)
            b = wb[2 * i + 1][0]                                # (1,   d_out)
            h = jnp.dot(h, W, preferred_element_type=jnp.float32) + b
            if i < num_layers - 1:
                h = jnp.maximum(h, 0.0)
        out_ref[0] = h

    return kernel


def _block_diag(W):
    """(E, d_in, d_out) -> (E*d_in, E*d_out) block diagonal."""
    E, din, dout = W.shape
    eye = jnp.eye(E, dtype=W.dtype)
    return (eye[:, None, :, None] * W[:, :, None, :]).reshape(E * din, E * dout)


# ----------------------------------------------------------------------------
# Module (parameters + cached pallas_call wrappers)
# ----------------------------------------------------------------------------
class ParallelizedEnsemblePallas:
    def __init__(self, ensemble_size, hidden_sizes, input_size, output_size,
                 key, b_init_value=0.0):
        # TODO(synk): separate_mean_var=True (second output head) not implemented.
        self.ensemble_size = ensemble_size
        self.input_size = input_size
        self.output_size = output_size

        self.input_mu = jnp.zeros((input_size,), jnp.float32)
        self.input_std = jnp.ones((input_size,), jnp.float32)

        # ParallelizedLayer init: W = fmod(randn, 2) * (1/(2*sqrt(in))), b = b_init
        self.layers = []
        in_size = input_size
        keys = jax.random.split(key, len(hidden_sizes) + 1)
        for k, next_size in zip(keys[:-1], hidden_sizes):
            w_std = 1.0 / (2.0 * np.sqrt(in_size))
            W = jnp.fmod(jax.random.normal(
                k, (ensemble_size, in_size, next_size), jnp.float32), 2.0) * w_std
            b = jnp.full((ensemble_size, 1, next_size), b_init_value, jnp.float32)
            self.layers.append((W, b))
            in_size = next_size
        w_std = 1.0 / (2.0 * np.sqrt(in_size))
        W = jnp.fmod(jax.random.normal(
            keys[-1], (ensemble_size, in_size, output_size), jnp.float32), 2.0) * w_std
        b = jnp.full((ensemble_size, 1, output_size), b_init_value, jnp.float32)
        self.layers.append((W, b))

        self._fwd_cache = {}
        self._pack_params()

    # -- parameter packing (done once; re-run if input_mu/std are refit) -----
    def _pack_params(self):
        # TODO(synk): call again after fit_input_stats() updates input_mu/std.
        E = self.ensemble_size
        std_c = jnp.maximum(self.input_std, 1e-12)       # avoid inf/NaN on std=0
        inv_std = 1.0 / std_c

        # Fold (x - mu) / std into layer 1:  W1' = W1 * inv_std[:, None]
        #                                    b1' = b1 - (mu * inv_std) @ W1
        W1, b1 = self.layers[0]
        W1f = W1 * inv_std[None, :, None]
        b1f = b1 - jnp.einsum('i,eio->eo', self.input_mu * inv_std, W1)[:, None, :]
        self.folded_layers = [(W1f, b1f)] + list(self.layers[1:])

        # Shared-input packing: layer 1 concatenated along d_out, the rest
        # block-diagonal, so the whole ensemble runs as one 2-D matmul chain.
        packed = []
        h1 = W1f.shape[2]
        Wp = jnp.transpose(W1f, (1, 0, 2)).reshape(self.input_size, E * h1)
        bp = b1f[:, 0, :].reshape(1, E * h1)
        packed.append((Wp, bp))
        for (W, b) in self.layers[1:]:
            packed.append((_block_diag(W), b[:, 0, :].reshape(1, -1)))
        self.packed_layers = packed

    # -- cached pallas_call builders ------------------------------------------
    def _get_shared_fn(self, B):
        key = ("shared", B)
        if key in self._fwd_cache:
            return self._fwd_cache[key]

        E, Dout = self.ensemble_size, self.output_size
        num_layers = len(self.packed_layers)
        out_dim = E * Dout

        # Tile the batch axis only when it is large (keeps v5e/v7x VMEM happy
        # and lets the B-grid pipeline / megacore at scale).
        tb = B if B <= 512 else 512
        grid = (pl.cdiv(B, tb),)

        in_specs = [pl.BlockSpec((tb, self.input_size), lambda i: (i, 0))]
        for (Wp, bp) in self.packed_layers:
            di, do = Wp.shape
            # constant block index -> weight tiles stay resident across B steps
            in_specs.append(pl.BlockSpec((di, do), lambda i: (0, 0)))
            in_specs.append(pl.BlockSpec((1, do), lambda i: (0, 0)))

        pc = pl.pallas_call(
            _packed_mlp_kernel(num_layers),
            out_shape=jax.ShapeDtypeStruct((B, out_dim), jnp.float32),
            grid=grid,
            in_specs=in_specs,
            out_specs=pl.BlockSpec((tb, out_dim), lambda i: (i, 0)),
            compiler_params=pltpu.CompilerParams(
                dimension_semantics=("parallel",)),
        )

        def fwd(x, *params):
            packed_out = pc(x, *params)                     # (B, E*Dout) lane-dense
            return jnp.transpose(packed_out.reshape(B, E, Dout), (1, 0, 2))

        fn = jax.jit(fwd)
        self._fwd_cache[key] = fn
        return fn

    def _get_member_fn(self, B):
        key = ("member", B)
        if key in self._fwd_cache:
            return self._fwd_cache[key]

        E, Din, Dout = self.ensemble_size, self.input_size, self.output_size
        num_layers = len(self.folded_layers)

        in_specs = [pl.BlockSpec((1, B, Din), lambda e: (e, 0, 0))]
        for (W, b) in self.folded_layers:
            di, do = W.shape[1], W.shape[2]
            in_specs.append(pl.BlockSpec((1, di, do), lambda e: (e, 0, 0)))
            in_specs.append(pl.BlockSpec((1, 1, do), lambda e: (e, 0, 0)))

        pc = pl.pallas_call(
            _member_mlp_kernel(num_layers),
            out_shape=jax.ShapeDtypeStruct((E, B, Dout), jnp.float32),
            grid=(E,),
            in_specs=in_specs,
            out_specs=pl.BlockSpec((1, B, Dout), lambda e: (e, 0, 0)),
            compiler_params=pltpu.CompilerParams(
                dimension_semantics=("parallel",)),
        )

        fn = jax.jit(lambda x, *params: pc(x, *params))
        self._fwd_cache[key] = fn
        return fn

    # -- forward ----------------------------------------------------------------
    def forward(self, inputs):
        dim = inputs.ndim
        x = inputs.astype(jnp.float32)
        if dim == 1:
            x = x[None, :]                                   # (1, Din)

        if x.ndim == 2:
            # replicated-input path: no (E, B, D) materialization, single grid
            B = x.shape[0]
            fn = self._get_shared_fn(B)
            params = [p for wb in self.packed_layers for p in wb]
            out = fn(x, *params)                             # (E, B, Dout)
        else:
            # genuine per-member 3-D input: keep per-member matmuls
            assert x.shape[0] == self.ensemble_size and x.shape[2] == self.input_size
            B = x.shape[1]
            fn = self._get_member_fn(B)
            params = [p for wb in self.folded_layers for p in wb]
            out = fn(x, *params)                             # (E, B, Dout)

        if dim == 1:
            out = out[:, 0, :]                               # matches .squeeze(1)
        return out


# ----------------------------------------------------------------------------
# Pure-JAX reference (same semantics as the PyTorch forward)
# ----------------------------------------------------------------------------
def reference_forward(model, inputs):
    dim = inputs.ndim
    std_c = jnp.maximum(model.input_std, 1e-12)
    h = (inputs.astype(jnp.float32) - model.input_mu) / std_c
    if dim < 3:
        if dim == 1:
            h = h[None, :]
        h = jnp.broadcast_to(h[None], (model.ensemble_size,) + h.shape)
    for i, (W, b) in enumerate(model.layers):
        h = h @ W + b
        if i < len(model.layers) - 1:
            h = jax.nn.relu(h)
    if dim == 1:
        h = h[:, 0, :]
    return h


if __name__ == "__main__":
    key = jax.random.PRNGKey(0)
    k_param, k_in, k_in3 = jax.random.split(key, 3)

    # Small shapes consistent with the module: batch=8, input=16,
    # hidden=(32, 32), output=8, ensemble=4.
    ensemble_size = 4
    hidden_sizes = (32, 32)
    input_size = 16
    output_size = 8
    batch = 8

    model = ParallelizedEnsemblePallas(
        ensemble_size, hidden_sizes, input_size, output_size, k_param)

    # shared (2-D) input path
    x2 = jax.random.normal(k_in, (batch, input_size), jnp.float32)
    out2 = jax.block_until_ready(model.forward(x2))
    ref2 = reference_forward(model, x2)
    assert out2.shape == (ensemble_size, batch, output_size), out2.shape
    np.testing.assert_allclose(np.asarray(out2), np.asarray(ref2),
                               rtol=1e-5, atol=1e-4)

    # per-member (3-D) input path
    x3 = jax.random.normal(k_in3, (ensemble_size, batch, input_size), jnp.float32)
    out3 = jax.block_until_ready(model.forward(x3))
    ref3 = reference_forward(model, x3)
    assert out3.shape == (ensemble_size, batch, output_size), out3.shape
    np.testing.assert_allclose(np.asarray(out3), np.asarray(ref3),
                               rtol=1e-5, atol=1e-4)

    print("KERNEL_OK")
</pallas_src>

<mosaic_0001>
module attributes {stable_mosaic.version = 11 : i64} {
  func.func @kernel(%arg0: i32, %arg1: memref<8x16xf32, #tpu.memory_space<vmem>>, %arg2: memref<16x128xf32, #tpu.memory_space<vmem>>, %arg3: memref<1x128xf32, #tpu.memory_space<vmem>>, %arg4: memref<128x128xf32, #tpu.memory_space<vmem>>, %arg5: memref<1x128xf32, #tpu.memory_space<vmem>>, %arg6: memref<128x32xf32, #tpu.memory_space<vmem>>, %arg7: memref<1x32xf32, #tpu.memory_space<vmem>>, %arg8: memref<8x32xf32, #tpu.memory_space<vmem>>) attributes {dimension_semantics = [#tpu.dimension_semantics<parallel>], iteration_bounds = array<i64: 1>, scalar_prefetch = 0 : i64, scratch_operands = 0 : i64, tpu.core_type = #tpu.core_type<tc>, window_params = [{transform_indices = @transform_0, window_bounds = array<i64: 8, 16>}, {pipeline_mode = #tpu.pipeline_mode<synchronous>, transform_indices = @transform_1, window_bounds = array<i64: 16, 128>}, {pipeline_mode = #tpu.pipeline_mode<synchronous>, transform_indices = @transform_2, window_bounds = array<i64: 1, 128>}, {pipeline_mode = #tpu.pipeline_mode<synchronous>, transform_indices = @transform_3, window_bounds = array<i64: 128, 128>}, {pipeline_mode = #tpu.pipeline_mode<synchronous>, transform_indices = @transform_4, window_bounds = array<i64: 1, 128>}, {pipeline_mode = #tpu.pipeline_mode<synchronous>, transform_indices = @transform_5, window_bounds = array<i64: 128, 32>}, {pipeline_mode = #tpu.pipeline_mode<synchronous>, transform_indices = @transform_6, window_bounds = array<i64: 1, 32>}, {transform_indices = @transform_7, window_bounds = array<i64: 8, 32>}]} {
    %c0 = arith.constant 0 : index
    %c0_0 = arith.constant 0 : index
    %0 = vector.load %arg1[%c0, %c0_0] : memref<8x16xf32, #tpu.memory_space<vmem>>, vector<8x16xf32>
    %c0_1 = arith.constant 0 : index
    %c0_2 = arith.constant 0 : index
    %1 = vector.load %arg2[%c0_1, %c0_2] : memref<16x128xf32, #tpu.memory_space<vmem>>, vector<16x128xf32>
    %c0_3 = arith.constant 0 : index
    %c0_4 = arith.constant 0 : index
    %2 = vector.load %arg3[%c0_3, %c0_4] : memref<1x128xf32, #tpu.memory_space<vmem>>, vector<1x128xf32>
    %cst = arith.constant dense<0.000000e+00> : vector<8x128xf32>
    %3 = tpu.matmul %0, %1, %cst {dimension_numbers = #tpu.dot_dimension_numbers<[1], [0], [0], [1], [0, 0, 1, 1], [], []>} : vector<8x16xf32>, vector<16x128xf32>, vector<8x128xf32> -> vector<8x128xf32>
    %4 = vector.broadcast %2 : vector<1x128xf32> to vector<8x128xf32>
    %5 = arith.addf %3, %4 : vector<8x128xf32>
    %cst_5 = arith.constant 0.000000e+00 : f32
    %6 = vector.broadcast %cst_5 : f32 to vector<8x128xf32>
    %7 = arith.maximumf %5, %6 : vector<8x128xf32>
    %c0_6 = arith.constant 0 : index
    %c0_7 = arith.constant 0 : index
    %8 = vector.load %arg4[%c0_6, %c0_7] : memref<128x128xf32, #tpu.memory_space<vmem>>, vector<128x128xf32>
    %c0_8 = arith.constant 0 : index
    %c0_9 = arith.constant 0 : index
    %9 = vector.load %arg5[%c0_8, %c0_9] : memref<1x128xf32, #tpu.memory_space<vmem>>, vector<1x128xf32>
    %cst_10 = arith.constant dense<0.000000e+00> : vector<8x128xf32>
    %10 = tpu.matmul %7, %8, %cst_10 {dimension_numbers = #tpu.dot_dimension_numbers<[1], [0], [0], [1], [0, 0, 1, 1], [], []>} : vector<8x128xf32>, vector<128x128xf32>, vector<8x128xf32> -> vector<8x128xf32>
    %11 = vector.broadcast %9 : vector<1x128xf32> to vector<8x128xf32>
    %12 = arith.addf %10, %11 : vector<8x128xf32>
    %cst_11 = arith.constant 0.000000e+00 : f32
    %13 = vector.broadcast %cst_11 : f32 to vector<8x128xf32>
    %14 = arith.maximumf %12, %13 : vector<8x128xf32>
    %c0_12 = arith.constant 0 : index
    %c0_13 = arith.constant 0 : index
    %15 = vector.load %arg6[%c0_12, %c0_13] : memref<128x32xf32, #tpu.memory_space<vmem>>, vector<128x32xf32>
    %c0_14 = arith.constant 0 : index
    %c0_15 = arith.constant 0 : index
    %16 = vector.load %arg7[%c0_14, %c0_15] : memref<1x32xf32, #tpu.memory_space<vmem>>, vector<1x32xf32>
    %cst_16 = arith.constant dense<0.000000e+00> : vector<8x32xf32>
    %17 = tpu.matmul %14, %15, %cst_16 {dimension_numbers = #tpu.dot_dimension_numbers<[1], [0], [0], [1], [0, 0, 1, 1], [], []>} : vector<8x128xf32>, vector<128x32xf32>, vector<8x32xf32> -> vector<8x32xf32>
    %18 = vector.broadcast %16 : vector<1x32xf32> to vector<8x32xf32>
    %19 = arith.addf %17, %18 : vector<8x32xf32>
    %c0_17 = arith.constant 0 : index
    %c0_18 = arith.constant 0 : index
    %20 = vector.load %arg8[%c0_17, %c0_18] : memref<8x32xf32, #tpu.memory_space<vmem>>, vector<8x32xf32>
    tpu.vector_store %arg8[%c0_17, %c0_18], %19 {strides = array<i32>} : memref<8x32xf32, #tpu.memory_space<vmem>>, vector<8x32xf32>,
    return
  }
  func.func @transform_0(%arg0: i32) -> (i32, i32) {
    %c0_i32 = arith.constant 0 : i32
    %c0_i32_0 = arith.constant 0 : i32
    return %arg0, %c0_i32 : i32, i32
  }
  func.func @transform_1(%arg0: i32) -> (i32, i32) {
    %c0_i32 = arith.constant 0 : i32
    %c0_i32_0 = arith.constant 0 : i32
    %c0_i32_1 = arith.constant 0 : i32
    return %c0_i32, %c0_i32_0 : i32, i32
  }
  func.func @transform_2(%arg0: i32) -> (i32, i32) {
    %c0_i32 = arith.constant 0 : i32
    %c0_i32_0 = arith.constant 0 : i32
    %c0_i32_1 = arith.constant 0 : i32
    return %c0_i32, %c0_i32_0 : i32, i32
  }
  func.func @transform_3(%arg0: i32) -> (i32, i32) {
    %c0_i32 = arith.constant 0 : i32
    %c0_i32_0 = arith.constant 0 : i32
    %c0_i32_1 = arith.constant 0 : i32
    return %c0_i32, %c0_i32_0 : i32, i32
  }
  func.func @transform_4(%arg0: i32) -> (i32, i32) {
    %c0_i32 = arith.constant 0 : i32
    %c0_i32_0 = arith.constant 0 : i32
    %c0_i32_1 = arith.constant 0 : i32
    return %c0_i32, %c0_i32_0 : i32, i32
  }
  func.func @transform_5(%arg0: i32) -> (i32, i32) {
    %c0_i32 = arith.constant 0 : i32
    %c0_i32_0 = arith.constant 0 : i32
    %c0_i32_1 = arith.constant 0 : i32
    return %c0_i32, %c0_i32_0 : i32, i32
  }
  func.func @transform_6(%arg0: i32) -> (i32, i32) {
    %c0_i32 = arith.constant 0 : i32
    %c0_i32_0 = arith.constant 0 : i32
    %c0_i32_1 = arith.constant 0 : i32
    return %c0_i32, %c0_i32_0 : i32, i32
  }
  func.func @transform_7(%arg0: i32) -> (i32, i32) {
    %c0_i32 = arith.constant 0 : i32
    %c0_i32_0 = arith.constant 0 : i32
    return %arg0, %c0_i32 : i32, i32
  }
}

</mosaic_0001>

<llo_original>
// kernel: fwd.1
$region0: #{fwd.1}
  #allocation0 [shape = 'u32[]', space=smem, size = 0x4, offset = 0x4, fixed_abs, tag = 'smem constant byte address 0x4 - core index']
  #allocation1 [shape = 'u32[72,128]{1,0:T(1,128)}', space=vmem, size = 0x9000, scoped, tag = 'internal scratch']
  %s0 = inlined_call_operand.vmem [shape: f32[8,16], index: 0, kind: input, shape index: {}]
  %s1 = inlined_call_operand.vmem [shape: f32[16,128], index: 1, kind: input, shape index: {}]
  %s2 = inlined_call_operand.vmem [shape: f32[1,128], index: 2, kind: input, shape index: {}]
  %s3 = inlined_call_operand.vmem [shape: f32[128,128], index: 3, kind: input, shape index: {}]
  %s4 = inlined_call_operand.vmem [shape: f32[1,128], index: 4, kind: input, shape index: {}]
  %s5 = inlined_call_operand.vmem [shape: f32[128,32], index: 5, kind: input, shape index: {}]
  %s6 = inlined_call_operand.vmem [shape: f32[1,32], index: 6, kind: input, shape index: {}]
  %s7 = inlined_call_operand.vmem [shape: f32[8,32], index: 7, kind: output, shape index: {}]
  %s8 = sld [smem:[#allocation0]]
  $region38: #{fwd.1} parent=0
    _
  %s10 = ssub.s32 1, %s8
  %s11 = scalar_select 0, %s10, %s8
  // Predicated region
  $region2: #{fwd.1} parent=0 // pred_check
    _
  $region3: #{fwd.1} parent=0 // pred_check_branch
    %13 = sbr.rel (0) target = $region5
  $region4: #{fwd.1} parent=0 // pred_region
    _
  $region5: #{fwd.1} parent=0 // pred_fallthru
    _
  // Predicated region
  $region6: #{fwd.1} parent=0 // pred_check
    _
  $region7: #{fwd.1} parent=0 // pred_check_branch
    %15 = sbr.rel (0) target = $region9
  $region8: #{fwd.1} parent=0 // pred_region
    _
  $region9: #{fwd.1} parent=0 // pred_fallthru
    _
  // Predicated region
  $region10: #{fwd.1} parent=0 // pred_check
    _
  $region11: #{fwd.1} parent=0 // pred_check_branch
    %17 = sbr.rel (0) target = $region13
  $region12: #{fwd.1} parent=0 // pred_region
    _
  $region13: #{fwd.1} parent=0 // pred_fallthru
    _
  // Predicated region
  $region14: #{fwd.1} parent=0 // pred_check
    _
  $region15: #{fwd.1} parent=0 // pred_check_branch
    %19 = sbr.rel (0) target = $region17
  $region16: #{fwd.1} parent=0 // pred_region
    _
  $region17: #{fwd.1} parent=0 // pred_fallthru
    _
  // Predicated region
  $region18: #{fwd.1} parent=0 // pred_check
    _
  $region19: #{fwd.1} parent=0 // pred_check_branch
    %21 = sbr.rel (0) target = $region21
  $region20: #{fwd.1} parent=0 // pred_region
    _
  $region21: #{fwd.1} parent=0 // pred_fallthru
    _
  // Predicated region
  $region22: #{fwd.1} parent=0 // pred_check
    _
  $region23: #{fwd.1} parent=0 // pred_check_branch
    %23 = sbr.rel (0) target = $region25
  $region24: #{fwd.1} parent=0 // pred_region
    _
  $region25: #{fwd.1} parent=0 // pred_fallthru
    _
  // Predicated region
  $region26: #{fwd.1} parent=0 // pred_check
    _
  $region27: #{fwd.1} parent=0 // pred_check_branch
    %25 = sbr.rel (0) target = $region29
  $region28: #{fwd.1} parent=0 // pred_region
    _
  $region29: #{fwd.1} parent=0 // pred_fallthru
    _
  %v26 = vld [vmem:[%s0] sm:$0xff]
  %v27 = vld [vmem:[%s1] sm:$0xff]
  %v28 = vld [vmem:[%s1 + $0x8] sm:$0xff]
  %v29 = vld [vmem:[%s2] sm:$0x1]
  %v31 = vperm.slane %v29, 0
  %vm33 = vcmask 130048
  %v35 = vsel %vm33, %v26, 0
  %37 = vmatpush.msra.mxu0 0.0
  %38 = vmatpush.msra.mxu0 0.0
  %39 = vmatpush.msra.mxu0 0.0
  %40 = vmatpush.msra.mxu0 0.0
  %41 = vmatpush.msra.mxu0 0.0
  %42 = vmatpush.msra.mxu0 0.0
  %43 = vmatpush.msra.mxu0 0.0
  %44 = vmatpush.msra.mxu0 0.0
  %45 = vmatpush.msra.mxu0 0.0
  %46 = vmatpush.msra.mxu0 0.0
  %47 = vmatpush.msra.mxu0 0.0
  %48 = vmatpush.msra.mxu0 0.0
  %49 = vmatpush.msra.mxu0 0.0
  %50 = vmatpush.msra.mxu0 0.0
  %51 = vmatpush.msra.mxu0 %v28
  %52 = vmatpush.msra.mxu0 %v27
  %53 = vmatmul.f32.gmra.mxu0 %v35
  %v54 = vpop.f32.mrf.mxu0
  %v55 = vadd.f32 %v31, %v54
  %56 = vdwg.mxu0
  %v57 = vmax.f32 %v55, 0.0
  %v58 = vld [vmem:[%s3] sm:$0xff]
  %v59 = vld [vmem:[%s3 + $0x8] sm:$0xff]
  %v60 = vld [vmem:[%s3 + $0x10] sm:$0xff]
  %v61 = vld [vmem:[%s3 + $0x18] sm:$0xff]
  %v62 = vld [vmem:[%s3 + $0x20] sm:$0xff]
  %v63 = vld [vmem:[%s3 + $0x28] sm:$0xff]
  %v64 = vld [vmem:[%s3 + $0x30] sm:$0xff]
  %v65 = vld [vmem:[%s3 + $0x38] sm:$0xff]
  %v66 = vld [vmem:[%s3 + $0x40] sm:$0xff]
  %v67 = vld [vmem:[%s3 + $0x48] sm:$0xff]
  %v68 = vld [vmem:[%s3 + $0x50] sm:$0xff]
  %v69 = vld [vmem:[%s3 + $0x58] sm:$0xff]
  %v70 = vld [vmem:[%s3 + $0x60] sm:$0xff]
  %v71 = vld [vmem:[%s3 + $0x68] sm:$0xff]
  %v72 = vld [vmem:[%s3 + $0x70] sm:$0xff]
  %v73 = vld [vmem:[%s3 + $0x78] sm:$0xff]
  %v74 = vld [vmem:[%s4] sm:$0x1]
  %v76 = vperm.slane %v74, 0
  %78 = vmatpush.msra.mxu0 %v73
  %79 = vmatpush.msra.mxu0 %v72
  %80 = vmatpush.msra.mxu0 %v71
  %81 = vmatpush.msra.mxu0 %v70
  %82 = vmatpush.msra.mxu0 %v69
  %83 = vmatpush.msra.mxu0 %v68
  %84 = vmatpush.msra.mxu0 %v67
  %85 = vmatpush.msra.mxu0 %v66
  %86 = vmatpush.msra.mxu0 %v65
  %87 = vmatpush.msra.mxu0 %v64
  %88 = vmatpush.msra.mxu0 %v63
  %89 = vmatpush.msra.mxu0 %v62
  %90 = vmatpush.msra.mxu0 %v61
  %91 = vmatpush.msra.mxu0 %v60
  %92 = vmatpush.msra.mxu0 %v59
  %93 = vmatpush.msra.mxu0 %v58
  %94 = vmatmul.f32.gmra.mxu0 %v57
  %v95 = vpop.f32.mrf.mxu0
  %v96 = vadd.f32 %v76, %v95
  %97 = vdwg.mxu0
  %v98 = vmax.f32 %v96, 0.0
  %v99 = vld [vmem:[%s5] sm:$0xff]
  %v100 = vld [vmem:[%s5 + $0x8] sm:$0xff]
  %v101 = vld [vmem:[%s5 + $0x10] sm:$0xff]
  %v102 = vld [vmem:[%s5 + $0x18] sm:$0xff]
  %v103 = vld [vmem:[%s5 + $0x20] sm:$0xff]
  %v104 = vld [vmem:[%s5 + $0x28] sm:$0xff]
  %v105 = vld [vmem:[%s5 + $0x30] sm:$0xff]
  %v106 = vld [vmem:[%s5 + $0x38] sm:$0xff]
  %v107 = vld [vmem:[%s5 + $0x40] sm:$0xff]
  %v108 = vld [vmem:[%s5 + $0x48] sm:$0xff]
  %v109 = vld [vmem:[%s5 + $0x50] sm:$0xff]
  %v110 = vld [vmem:[%s5 + $0x58] sm:$0xff]
  %v111 = vld [vmem:[%s5 + $0x60] sm:$0xff]
  %v112 = vld [vmem:[%s5 + $0x68] sm:$0xff]
  %v113 = vld [vmem:[%s5 + $0x70] sm:$0xff]
  %v114 = vld [vmem:[%s5 + $0x78] sm:$0xff]
  %v115 = vld [vmem:[%s6] sm:$0x1]
  %v117 = vperm.slane %v115, 0
  %119 = vmatpush.msra.mxu0 %v114
  %120 = vmatpush.msra.mxu0 %v113
  %121 = vmatpush.msra.mxu0 %v112
  %122 = vmatpush.msra.mxu0 %v111
  %123 = vmatpush.msra.mxu0 %v110
  %124 = vmatpush.msra.mxu0 %v109
  %125 = vmatpush.msra.mxu0 %v108
  %126 = vmatpush.msra.mxu0 %v107
  %127 = vmatpush.msra.mxu0 %v106
  %128 = vmatpush.msra.mxu0 %v105
  %129 = vmatpush.msra.mxu0 %v104
  %130 = vmatpush.msra.mxu0 %v103
  %131 = vmatpush.msra.mxu0 %v102
  %132 = vmatpush.msra.mxu0 %v101
  %133 = vmatpush.msra.mxu0 %v100
  %134 = vmatpush.msra.mxu0 %v99
  %135 = vmatmul.f32.gmra.mxu0 %v98
  %v136 = vpop.f32.mrf.mxu0
  %v137 = vadd.f32 %v117, %v136
  %138 = vdwg.mxu0
  %vm139 = vcmask 261120
  %140 = vst.msk [vmem:[%s7] sm:$0xff] %vm139, %v137
  // Predicated region
  $region30: #{fwd.1} parent=0 // pred_check
    _
  $region31: #{fwd.1} parent=0 // pred_check_branch
    %142 = sbr.rel (0) target = $region33
  $region32: #{fwd.1} parent=0 // pred_region
    _
  $region33: #{fwd.1} parent=0 // pred_fallthru
    _
  // Predicated region
  $region34: #{fwd.1} parent=0 // pred_check
    _
  $region35: #{fwd.1} parent=0 // pred_check_branch
    %144 = sbr.rel (0) target = $region37
  $region36: #{fwd.1} parent=0 // pred_region
    _
  $region37: #{fwd.1} parent=0 // pred_fallthru
    _

</llo_original>
